<compile_context>
chip_gen: v5e
topology: v5e:2x2
jax: 0.10.0
libtpu: 0.0.40
codegen_flags: <defaults>
</compile_context>

<pallas_src>
import functools

import jax
import jax.numpy as jnp
from jax.experimental import pallas as pl
from jax.experimental.pallas import tpu as pltpu


def _pick_tile(n: int, target: int, quantum: int) -> int:
    """Largest tile t for a dim of size n with t == n, or
    (t <= target, t % quantum == 0, n % t == 0)."""
    if n <= target:
        return n
    t = (target // quantum) * quantum
    while t >= quantum:
        if n % t == 0:
            return t
        t -= quantum
    # TODO(synk): pathological sizes (e.g. large primes) fall back to a
    # full-dim block; zero-pad in the wrapper instead if VMEM gets tight.
    return n


def _sum_mid_kernel(x_ref, o_ref, acc_ref):
    """x_ref: (TP, TR, TN) block; o_ref: (TP, TN); acc_ref: (TP, TN) f32."""
    k = pl.program_id(2)

    @pl.when(k == 0)
    def _():
        acc_ref[...] = jnp.zeros_like(acc_ref)

    acc_ref[...] += jnp.sum(x_ref[...].astype(acc_ref.dtype), axis=1)

    @pl.when(k == pl.num_programs(2) - 1)
    def _():
        o_ref[...] = acc_ref[...].astype(o_ref.dtype)


def _sum_last_kernel(x_ref, o_ref, acc_ref):
    """x_ref: (TP, TR) block; o_ref: (TP, 1); acc_ref: (TP, 1) f32."""
    k = pl.program_id(1)

    @pl.when(k == 0)
    def _():
        acc_ref[...] = jnp.zeros_like(acc_ref)

    acc_ref[...] += jnp.sum(x_ref[...].astype(acc_ref.dtype), axis=1,
                            keepdims=True)

    @pl.when(k == pl.num_programs(1) - 1)
    def _():
        o_ref[...] = acc_ref[...].astype(o_ref.dtype)


def _sum_mid_pallas(x3, acc_dtype, out_dtype):
    """Reduce the middle axis of (pre, r, post)."""
    pre, r, post = x3.shape
    tp = _pick_tile(pre, 32, 8)       # leading dim of the input block
    tr = _pick_tile(r, 32, 8)         # blocked reduction axis (sublane)
    tn = _pick_tile(post, 1024, 128)  # lane axis: large multiple of 128
    grid = (pre // tp, post // tn, r // tr)
    return pl.pallas_call(
        _sum_mid_kernel,
        out_shape=jax.ShapeDtypeStruct((pre, post), out_dtype),
        grid_spec=pltpu.PrefetchScalarGridSpec(
            num_scalar_prefetch=0,
            grid=grid,
            in_specs=[pl.BlockSpec((tp, tr, tn), lambda i, j, k: (i, k, j))],
            out_specs=pl.BlockSpec((tp, tn), lambda i, j, k: (i, j)),
            scratch_shapes=[pltpu.VMEM((tp, tn), acc_dtype)],
        ),
        compiler_params=pltpu.CompilerParams(
            dimension_semantics=("parallel", "parallel", "arbitrary"),
        ),
    )(x3)


def _sum_last_pallas(x2, acc_dtype, out_dtype):
    """Reduce the trailing (lane) axis of (pre, r) via in-kernel XLU reduce."""
    pre, r = x2.shape
    tp = _pick_tile(pre, 256, 8)
    tr = _pick_tile(r, 2048, 128)
    grid = (pre // tp, r // tr)
    return pl.pallas_call(
        _sum_last_kernel,
        out_shape=jax.ShapeDtypeStruct((pre, 1), out_dtype),
        grid_spec=pltpu.PrefetchScalarGridSpec(
            num_scalar_prefetch=0,
            grid=grid,
            in_specs=[pl.BlockSpec((tp, tr), lambda i, k: (i, k))],
            out_specs=pl.BlockSpec((tp, 1), lambda i, k: (i, 0)),
            scratch_shapes=[pltpu.VMEM((tp, 1), acc_dtype)],
        ),
        compiler_params=pltpu.CompilerParams(
            dimension_semantics=("parallel", "arbitrary"),
        ),
    )(x2)


# Below a few MiB the pallas_call launch / per-step overheads dominate and
# XLA's fused reduce wins; hand such sizes back to jnp.sum.
_SMALL_INPUT_BYTES = 2 * 1024 * 1024


@functools.partial(jax.jit, static_argnames=("dim", "force_pallas"))
def sum_layer(x: jax.Array, dim: int, *, force_pallas: bool = False) -> jax.Array:
    """Equivalent of SumLayer(dim)(x) == torch.sum(x, dim)."""
    ndim = x.ndim
    dim = dim % ndim
    shape = x.shape

    pre = 1
    for s in shape[:dim]:
        pre *= s
    r = shape[dim]
    post = 1
    for s in shape[dim + 1:]:
        post *= s
    out_shape_final = shape[:dim] + shape[dim + 1:]

    # TODO(synk): torch.sum promotes bool/int inputs to int64; JAX (x64 off)
    # cannot express int64, so non-float dtypes take the jnp.sum fallback.
    is_float = jnp.issubdtype(x.dtype, jnp.floating)
    small = x.size * x.dtype.itemsize < _SMALL_INPUT_BYTES
    if (not is_float) or x.size == 0 or ((not force_pallas) and small):
        return jnp.sum(x, axis=dim)

    acc_dtype = jnp.float32   # f32 accumulation for bf16/fp16 inputs too
    out_dtype = x.dtype

    if post == 1:
        # Reducing the trailing (lane) axis: cross-lane reduce in-kernel,
        # no relayout of the minor axis.
        out = _sum_last_pallas(x.reshape(pre, r), acc_dtype, out_dtype)
    else:
        out = _sum_mid_pallas(x.reshape(pre, r, post), acc_dtype, out_dtype)

    return out.reshape(out_shape_final)


if __name__ == "__main__":
    key = jax.random.PRNGKey(0)
    # Small NCHW-style input, consistent with a typical SumLayer(dim=1) use.
    x = jax.random.normal(key, (2, 4, 16, 16), dtype=jnp.float32)

    # Exercise the Pallas kernels (force_pallas bypasses the tiny-input
    # jnp.sum fast path) on every reduction dim, plus a bf16 case and a
    # slightly larger case whose reduction axis spans multiple grid steps.
    cases = [
        (x, 0), (x, 1), (x, 2), (x, 3),
        (jax.random.normal(jax.random.PRNGKey(1), (4, 64, 256),
                           dtype=jnp.float32), 1),
        (jax.random.normal(jax.random.PRNGKey(2), (2, 4, 16, 16),
                           dtype=jnp.bfloat16), 1),
    ]
    for xi, d in cases:
        y = jax.block_until_ready(sum_layer(xi, d, force_pallas=True))
        y_ref = jnp.sum(xi, axis=d)
        assert y.shape == y_ref.shape, (d, y.shape, y_ref.shape)
        assert y.dtype == y_ref.dtype, (d, y.dtype, y_ref.dtype)
        tol = 1e-5 if xi.dtype == jnp.float32 else 2e-2
        assert jnp.allclose(y.astype(jnp.float32), y_ref.astype(jnp.float32),
                            atol=tol, rtol=tol), (d, str(xi.dtype))

    # Default (non-forced) path on the reference shape still matches.
    y = jax.block_until_ready(sum_layer(x, 1))
    assert jnp.allclose(y, jnp.sum(x, axis=1), atol=1e-5, rtol=1e-5)

    print("KERNEL_OK")
</pallas_src>

<mosaic_0001>
module attributes {stable_mosaic.version = 11 : i64} {
  func.func @_sum_mid_kernel(%arg0: i32, %arg1: i32, %arg2: i32, %arg3: memref<1x2x1024xf32, #tpu.memory_space<vmem>>, %arg4: memref<1x1024xf32, #tpu.memory_space<vmem>>, %arg5: memref<1x1024xf32, #tpu.memory_space<vmem>>) attributes {dimension_semantics = [#tpu.dimension_semantics<parallel>, #tpu.dimension_semantics<parallel>, #tpu.dimension_semantics<arbitrary>], iteration_bounds = array<i64: 1, 1, 1>, scalar_prefetch = 0 : i64, scratch_operands = 1 : i64, tpu.core_type = #tpu.core_type<tc>, window_params = [{transform_indices = @transform_0, window_bounds = array<i64: 1, 2, 1024>}, {transform_indices = @transform_1, window_bounds = array<i64: 1, 1024>}]} {
    %c0_i32 = arith.constant 0 : i32
    %0 = arith.cmpi eq, %arg2, %c0_i32 : i32
    %1 = arith.extui %0 : i1 to i32
    %c0_i32_0 = arith.constant 0 : i32
    %2 = arith.cmpi ne, %1, %c0_i32_0 : i32
    scf.if %2 {
      %cst_9 = arith.constant 0.000000e+00 : f32
      %11 = vector.broadcast %cst_9 : f32 to vector<1x1024xf32>
      %c0_10 = arith.constant 0 : index
      %c0_11 = arith.constant 0 : index
      %12 = vector.load %arg5[%c0_10, %c0_11] : memref<1x1024xf32, #tpu.memory_space<vmem>>, vector<1x1024xf32>
      tpu.vector_store %arg5[%c0_10, %c0_11], %11 {strides = array<i32>} : memref<1x1024xf32, #tpu.memory_space<vmem>>, vector<1x1024xf32>,
    } else {
    }
    %c0 = arith.constant 0 : index
    %c0_1 = arith.constant 0 : index
    %3 = vector.load %arg5[%c0, %c0_1] : memref<1x1024xf32, #tpu.memory_space<vmem>>, vector<1x1024xf32>
    %c0_2 = arith.constant 0 : index
    %c0_3 = arith.constant 0 : index
    %c0_4 = arith.constant 0 : index
    %4 = vector.load %arg3[%c0_2, %c0_3, %c0_4] : memref<1x2x1024xf32, #tpu.memory_space<vmem>>, vector<1x2x1024xf32>
    %cst = arith.constant dense<0.000000e+00> : vector<1x1024xf32>
    %5 = vector.multi_reduction <add>, %4, %cst [1] : vector<1x2x1024xf32> to vector<1x1024xf32>
    %6 = arith.addf %3, %5 : vector<1x1024xf32>
    %c0_5 = arith.constant 0 : index
    %c0_6 = arith.constant 0 : index
    %7 = vector.load %arg5[%c0_5, %c0_6] : memref<1x1024xf32, #tpu.memory_space<vmem>>, vector<1x1024xf32>
    tpu.vector_store %arg5[%c0_5, %c0_6], %6 {strides = array<i32>} : memref<1x1024xf32, #tpu.memory_space<vmem>>, vector<1x1024xf32>,
    %c0_i32_7 = arith.constant 0 : i32
    %8 = arith.cmpi eq, %arg2, %c0_i32_7 : i32
    %9 = arith.extui %8 : i1 to i32
    %c0_i32_8 = arith.constant 0 : i32
    %10 = arith.cmpi ne, %9, %c0_i32_8 : i32
    scf.if %10 {
      %c0_9 = arith.constant 0 : index
      %c0_10 = arith.constant 0 : index
      %11 = vector.load %arg5[%c0_9, %c0_10] : memref<1x1024xf32, #tpu.memory_space<vmem>>, vector<1x1024xf32>
      %c0_11 = arith.constant 0 : index
      %c0_12 = arith.constant 0 : index
      %12 = vector.load %arg4[%c0_11, %c0_12] : memref<1x1024xf32, #tpu.memory_space<vmem>>, vector<1x1024xf32>
      tpu.vector_store %arg4[%c0_11, %c0_12], %11 {strides = array<i32>} : memref<1x1024xf32, #tpu.memory_space<vmem>>, vector<1x1024xf32>,
    } else {
    }
    return
  }
  func.func @transform_0(%arg0: i32, %arg1: i32, %arg2: i32) -> (i32, i32, i32) {
    %c0_i32 = arith.constant 0 : i32
    return %arg0, %arg2, %arg1 : i32, i32, i32
  }
  func.func @transform_1(%arg0: i32, %arg1: i32, %arg2: i32) -> (i32, i32) {
    %c0_i32 = arith.constant 0 : i32
    return %arg0, %arg1 : i32, i32
  }
}

</mosaic_0001>

<llo_original>
// kernel: sum_layer.1
$region0: #{sum_layer.1}
  #allocation0 [shape = 'u32[]', space=smem, size = 0x4, offset = 0x4, fixed_abs, tag = 'smem constant byte address 0x4 - core index']
  #allocation1 [shape = 'u32[72,128]{1,0:T(1,128)}', space=vmem, size = 0x9000, scoped, tag = 'internal scratch']
  #allocation2 [shape = 'f32[1,1024]{1,0:T(1,128)}', space=vmem, size = 0x1000, scoped, tag = 'scratch operand']
  %s0 = inlined_call_operand.vmem [shape: f32[1,2,1024], index: 0, kind: input, shape index: {}]
  %s1 = inlined_call_operand.vmem [shape: f32[1,1024], index: 1, kind: output, shape index: {}]
  %s2 = sld [smem:[#allocation0]]
  $region22: #{sum_layer.1} parent=0
    _
  %s4 = ssub.s32 1, %s2
  %s5 = scalar_select 0, %s4, %s2
  // Predicated region
  $region2: #{sum_layer.1} parent=0 // pred_check
    _
  $region3: #{sum_layer.1} parent=0 // pred_check_branch
    %7 = sbr.rel (0) target = $region5
  $region4: #{sum_layer.1} parent=0 // pred_region
    _
  $region5: #{sum_layer.1} parent=0 // pred_fallthru
    _
  %p8 = scmp.eq.s32.totalorder 0, 0
  // Predicated region
  $region6: #{sum_layer.1} parent=0 // pred_check
    %p9 = pneg %p8
  $region7: #{sum_layer.1} parent=0 // pred_check_branch
    %11 = sbr.rel (%p9) target = $region9
  $region8: #{sum_layer.1} parent=0 // pred_region
    %12 = vst [vmem:[#allocation2] sm:$0xff] 0.0
  $region9: #{sum_layer.1} parent=0 // pred_fallthru
    _
  %v13 = vld [vmem:[#allocation2] sm:$0xff]
  %v14 = vld [vmem:[%s0] sm:$0xff]
  %v15 = vld [vmem:[%s0 + $0x8] sm:$0xff]
  %18 = vst [vmem:[#allocation1] ss:$4 sm:$0xff] %v14
  %s19 = scalar_lea.vmem [#allocation1], 32
  %20 = vst [vmem:[%s19] ss:$4 sm:$0xff] %v15
  %v21 = vld.sshfl [vmem:[#allocation1] sm:$0xff pattern:$0x73625140]
  %v22 = vld.sshfl [vmem:[#allocation1 + $0x8] sm:$0xff pattern:$0x73625140]
  %v23 = vld.sshfl [vmem:[#allocation1 + $0x10] sm:$0xff pattern:$0x73625140]
  %v24 = vld.sshfl [vmem:[#allocation1 + $0x18] sm:$0xff pattern:$0x73625140]
  %v25 = vld.sshfl [vmem:[#allocation1 + $0x20] sm:$0xff pattern:$0x73625140]
  %v26 = vld.sshfl [vmem:[#allocation1 + $0x28] sm:$0xff pattern:$0x73625140]
  %v27 = vld.sshfl [vmem:[#allocation1 + $0x30] sm:$0xff pattern:$0x73625140]
  %v28 = vld.sshfl [vmem:[#allocation1 + $0x38] sm:$0xff pattern:$0x73625140]
  %vm37 = vcmask 1041408
  %v38 = vsel %vm37, %v21, 0.0
  %v39 = vrot.slane %v38, 4
  %v40 = vadd.f32 %v38, %v39
  %v41 = vrot.slane %v40, 2
  %v42 = vadd.f32 %v40, %v41
  %v43 = vrot.slane %v42, 1
  %v44 = vadd.f32 %v42, %v43
  %v45 = vsel %vm37, %v22, 0.0
  %v46 = vrot.slane %v45, 4
  %v47 = vadd.f32 %v45, %v46
  %v48 = vrot.slane %v47, 2
  %v49 = vadd.f32 %v47, %v48
  %v50 = vrot.slane %v49, 1
  %v51 = vadd.f32 %v49, %v50
  %v52 = vsel %vm37, %v23, 0.0
  %v53 = vrot.slane %v52, 4
  %v54 = vadd.f32 %v52, %v53
  %v55 = vrot.slane %v54, 2
  %v56 = vadd.f32 %v54, %v55
  %v57 = vrot.slane %v56, 1
  %v58 = vadd.f32 %v56, %v57
  %v59 = vsel %vm37, %v24, 0.0
  %v60 = vrot.slane %v59, 4
  %v61 = vadd.f32 %v59, %v60
  %v62 = vrot.slane %v61, 2
  %v63 = vadd.f32 %v61, %v62
  %v64 = vrot.slane %v63, 1
  %v65 = vadd.f32 %v63, %v64
  %v66 = vsel %vm37, %v25, 0.0
  %v67 = vrot.slane %v66, 4
  %v68 = vadd.f32 %v66, %v67
  %v69 = vrot.slane %v68, 2
  %v70 = vadd.f32 %v68, %v69
  %v71 = vrot.slane %v70, 1
  %v72 = vadd.f32 %v70, %v71
  %v73 = vsel %vm37, %v26, 0.0
  %v74 = vrot.slane %v73, 4
  %v75 = vadd.f32 %v73, %v74
  %v76 = vrot.slane %v75, 2
  %v77 = vadd.f32 %v75, %v76
  %v78 = vrot.slane %v77, 1
  %v79 = vadd.f32 %v77, %v78
  %v80 = vsel %vm37, %v27, 0.0
  %v81 = vrot.slane %v80, 4
  %v82 = vadd.f32 %v80, %v81
  %v83 = vrot.slane %v82, 2
  %v84 = vadd.f32 %v82, %v83
  %v85 = vrot.slane %v84, 1
  %v86 = vadd.f32 %v84, %v85
  %v87 = vsel %vm37, %v28, 0.0
  %v88 = vrot.slane %v87, 4
  %v89 = vadd.f32 %v87, %v88
  %v90 = vrot.slane %v89, 2
  %v91 = vadd.f32 %v89, %v90
  %v92 = vrot.slane %v91, 1
  %v93 = vadd.f32 %v91, %v92
  %v102 = vrot.slane %v51, 7
  %v103 = vrot.slane %v58, 6
  %v104 = vrot.slane %v65, 5
  %v105 = vrot.slane %v72, 4
  %v106 = vrot.slane %v79, 3
  %v107 = vrot.slane %v86, 2
  %v108 = vrot.slane %v93, 1
  %vm109 = vcmask 1040384
  %v110 = vsel %vm109, %v44, %v102
  %vm111 = vcmask 1042434
  %v112 = vsel %vm111, %v103, %v104
  %v113 = vsel %vm37, %v110, %v112
  %vm114 = vcmask 1044484
  %v115 = vsel %vm114, %v105, %v106
  %vm116 = vcmask 1046534
  %v117 = vsel %vm116, %v107, %v108
  %vm118 = vcmask 1045508
  %v119 = vsel %vm118, %v115, %v117
  %vm120 = vcmask 1043456
  %v121 = vsel %vm120, %v113, %v119
  %v123 = vadd.f32 %v13, %v121
  %124 = vst [vmem:[#allocation2] sm:$0xff] %v123
  // Predicated region
  $region10: #{sum_layer.1} parent=0 // pred_check
    %p125 = pneg %p8
  $region11: #{sum_layer.1} parent=0 // pred_check_branch
    %127 = sbr.rel (%p125) target = $region13
  $region12: #{sum_layer.1} parent=0 // pred_region
    %v128 = vld [vmem:[#allocation2] sm:$0xff]
    %129 = vst [vmem:[%s1] sm:$0xff] %v128
  $region13: #{sum_layer.1} parent=0 // pred_fallthru
    _
  // Predicated region
  $region14: #{sum_layer.1} parent=0 // pred_check
    _
  $region15: #{sum_layer.1} parent=0 // pred_check_branch
    %131 = sbr.rel (0) target = $region17
  $region16: #{sum_layer.1} parent=0 // pred_region
    _
  $region17: #{sum_layer.1} parent=0 // pred_fallthru
    _
  // Predicated region
  $region18: #{sum_layer.1} parent=0 // pred_check
    _
  $region19: #{sum_layer.1} parent=0 // pred_check_branch
    %133 = sbr.rel (0) target = $region21
  $region20: #{sum_layer.1} parent=0 // pred_region
    _
  $region21: #{sum_layer.1} parent=0 // pred_fallthru
    _

</llo_original>
